<compile_context>
chip_gen: v7x
topology: tpu7x:2x2x1
jax: 0.10.0
libtpu: 0.0.40
codegen_flags: <defaults>
</compile_context>

<pallas_src>
import jax
import jax.numpy as jnp
from jax.experimental import pallas as pl
from jax.experimental.pallas import tpu as pltpu


def value_net_kernel(x_ref, w1_ref, b1_ref, w2_ref, b2_ref, w3_ref, b3_ref, o_ref):
    # fc1 + relu: bf16 MXU inputs, f32 accumulation, f32 elementwise on VPU.
    h1 = jnp.dot(x_ref[...], w1_ref[...], preferred_element_type=jnp.float32)
    h1 = jnp.maximum(h1 + b1_ref[...], 0.0)
    # fc2 + relu
    h2 = jnp.dot(h1.astype(jnp.bfloat16), w2_ref[...],
                 preferred_element_type=jnp.float32)
    h2 = jnp.maximum(h2 + b2_ref[...], 0.0)
    # fc3 (no activation, matching ValueNetwork.forward); output is lane-padded.
    h3 = jnp.dot(h2.astype(jnp.bfloat16), w3_ref[...],
                 preferred_element_type=jnp.float32)
    o_ref[...] = (h3 + b3_ref[...]).astype(o_ref.dtype)


def value_network_forward(x, w1, b1, w2, b2, w3, b3, *, block_batch=256):
    """Fused forward pass. Weights are [in, out]; biases are [1, out]."""
    B, n_states = x.shape
    fc1_dims = w1.shape[1]
    fc2_dims = w2.shape[1]
    n_actions = w3.shape[1]

    LANE = 128
    SUBLANE = 8
    n_out_pad = ((n_actions + LANE - 1) // LANE) * LANE  # lane-dense output width

    # Zero-pad fc3 weights/bias to the padded output width (extra lanes stay 0,
    # so the padded output columns are exactly b3_pad = 0 and are sliced away).
    w3p = jnp.zeros((fc2_dims, n_out_pad), w3.dtype).at[:, :n_actions].set(w3)
    b3p = jnp.zeros((1, n_out_pad), b3.dtype).at[:, :n_actions].set(b3)

    # Batch tile: sublane-aligned, capped at block_batch; pad batch to a multiple.
    BT = min(block_batch, max(SUBLANE, ((B + SUBLANE - 1) // SUBLANE) * SUBLANE))
    B_pad = ((B + BT - 1) // BT) * BT
    x_pad = jnp.pad(x, ((0, B_pad - B), (0, 0)))

    # bf16 MXU inputs (halves activation/weight DMA bytes); biases stay f32.
    x_bf = x_pad.astype(jnp.bfloat16)
    w1_bf = w1.astype(jnp.bfloat16)
    w2_bf = w2.astype(jnp.bfloat16)
    w3_bf = w3p.astype(jnp.bfloat16)

    grid = (B_pad // BT,)

    flops = 2 * B_pad * (n_states * fc1_dims
                         + fc1_dims * fc2_dims
                         + fc2_dims * n_out_pad)
    bytes_accessed = (x_bf.size * 2
                      + (w1_bf.size + w2_bf.size + w3_bf.size) * 2
                      + (b1.size + b2.size + b3p.size) * 4
                      + B_pad * n_out_pad * 4)

    def resident(shape):
        # Constant index_map -> block stays VMEM-resident across grid steps
        # (weights/biases are DMA'd once, not per batch tile).
        return pl.BlockSpec(shape, lambda i, _nd=len(shape): (0,) * _nd)

    out = pl.pallas_call(
        value_net_kernel,
        out_shape=jax.ShapeDtypeStruct((B_pad, n_out_pad), jnp.float32),
        grid=grid,
        in_specs=[
            pl.BlockSpec((BT, n_states), lambda i: (i, 0)),
            resident(w1_bf.shape), resident(b1.shape),
            resident(w2_bf.shape), resident(b2.shape),
            resident(w3_bf.shape), resident(b3p.shape),
        ],
        out_specs=pl.BlockSpec((BT, n_out_pad), lambda i: (i, 0)),
        compiler_params=pltpu.CompilerParams(
            dimension_semantics=("parallel",)),
        cost_estimate=pl.CostEstimate(
            flops=flops, transcendentals=0, bytes_accessed=bytes_accessed),
    )(x_bf, w1_bf, b1, w2_bf, b2, w3_bf, b3p)

    return out[:B, :n_actions]


def init_linear_params(key, fan_in, fan_out):
    """Deterministic init matching torch.nn.Linear's U(-1/sqrt(fan_in), 1/sqrt(fan_in))."""
    kw, kb = jax.random.split(key)
    bound = 1.0 / jnp.sqrt(jnp.float32(fan_in))
    # stored as [in, out] (transposed vs PyTorch's [out, in])
    w = jax.random.uniform(kw, (fan_in, fan_out), jnp.float32, -bound, bound)
    b = jax.random.uniform(kb, (1, fan_out), jnp.float32, -bound, bound)
    return w, b


if __name__ == "__main__":
    # Small shapes consistent with the module: n_states=8, n_actions=4,
    # fc1_dims=128, fc2_dims=64, batch=2.
    n_states, n_actions = 8, 4
    fc1_dims, fc2_dims = 128, 64
    batch = 2

    key = jax.random.PRNGKey(0)
    k_x, k1, k2, k3 = jax.random.split(key, 4)

    x = jax.random.normal(k_x, (batch, n_states), jnp.float32)
    w1, b1 = init_linear_params(k1, n_states, fc1_dims)
    w2, b2 = init_linear_params(k2, fc1_dims, fc2_dims)
    w3, b3 = init_linear_params(k3, fc2_dims, n_actions)

    out = value_network_forward(x, w1, b1, w2, b2, w3, b3)
    jax.block_until_ready(out)

    # Pure-JAX f32 reference of the same forward pass; tolerance loosened for
    # the bf16 MXU-input path (accepted precision trade, ~0.2% per layer).
    ref = jnp.maximum(x @ w1 + b1, 0.0)
    ref = jnp.maximum(ref @ w2 + b2, 0.0)
    ref = ref @ w3 + b3
    assert out.shape == (batch, n_actions)
    assert jnp.allclose(out, ref, atol=2e-2, rtol=2e-2), (
        f"max abs err {jnp.max(jnp.abs(out - ref))}")

    print("KERNEL_OK")
</pallas_src>

<mosaic_0001>
module attributes {stable_mosaic.version = 11 : i64} {
  func.func @value_net_kernel(%arg0: i32, %arg1: memref<8x8xbf16, #tpu.memory_space<vmem>>, %arg2: memref<8x128xbf16, #tpu.memory_space<vmem>>, %arg3: memref<1x128xf32, #tpu.memory_space<vmem>>, %arg4: memref<128x64xbf16, #tpu.memory_space<vmem>>, %arg5: memref<1x64xf32, #tpu.memory_space<vmem>>, %arg6: memref<64x128xbf16, #tpu.memory_space<vmem>>, %arg7: memref<1x128xf32, #tpu.memory_space<vmem>>, %arg8: memref<8x128xf32, #tpu.memory_space<vmem>>) attributes {dimension_semantics = [#tpu.dimension_semantics<parallel>], iteration_bounds = array<i64: 1>, scalar_prefetch = 0 : i64, scratch_operands = 0 : i64, tpu.core_type = #tpu.core_type<tc>, window_params = [{transform_indices = @transform_0, window_bounds = array<i64: 8, 8>}, {pipeline_mode = #tpu.pipeline_mode<synchronous>, transform_indices = @transform_1, window_bounds = array<i64: 8, 128>}, {pipeline_mode = #tpu.pipeline_mode<synchronous>, transform_indices = @transform_2, window_bounds = array<i64: 1, 128>}, {pipeline_mode = #tpu.pipeline_mode<synchronous>, transform_indices = @transform_3, window_bounds = array<i64: 128, 64>}, {pipeline_mode = #tpu.pipeline_mode<synchronous>, transform_indices = @transform_4, window_bounds = array<i64: 1, 64>}, {pipeline_mode = #tpu.pipeline_mode<synchronous>, transform_indices = @transform_5, window_bounds = array<i64: 64, 128>}, {pipeline_mode = #tpu.pipeline_mode<synchronous>, transform_indices = @transform_6, window_bounds = array<i64: 1, 128>}, {transform_indices = @transform_7, window_bounds = array<i64: 8, 128>}]} {
    %c0 = arith.constant 0 : index
    %c0_0 = arith.constant 0 : index
    %0 = vector.load %arg1[%c0, %c0_0] : memref<8x8xbf16, #tpu.memory_space<vmem>>, vector<8x8xbf16>
    %c0_1 = arith.constant 0 : index
    %c0_2 = arith.constant 0 : index
    %1 = vector.load %arg2[%c0_1, %c0_2] : memref<8x128xbf16, #tpu.memory_space<vmem>>, vector<8x128xbf16>
    %cst = arith.constant dense<0.000000e+00> : vector<8x128xf32>
    %2 = tpu.matmul %0, %1, %cst {dimension_numbers = #tpu.dot_dimension_numbers<[1], [0], [0], [1], [0, 0, 1, 1], [], []>} : vector<8x8xbf16>, vector<8x128xbf16>, vector<8x128xf32> -> vector<8x128xf32>
    %c0_3 = arith.constant 0 : index
    %c0_4 = arith.constant 0 : index
    %3 = vector.load %arg3[%c0_3, %c0_4] : memref<1x128xf32, #tpu.memory_space<vmem>>, vector<1x128xf32>
    %4 = vector.broadcast %3 : vector<1x128xf32> to vector<8x128xf32>
    %5 = arith.addf %2, %4 : vector<8x128xf32>
    %cst_5 = arith.constant 0.000000e+00 : f32
    %6 = vector.broadcast %cst_5 : f32 to vector<8x128xf32>
    %7 = arith.maximumf %5, %6 : vector<8x128xf32>
    %8 = arith.truncf %7 : vector<8x128xf32> to vector<8x128xbf16>
    %c0_6 = arith.constant 0 : index
    %c0_7 = arith.constant 0 : index
    %9 = vector.load %arg4[%c0_6, %c0_7] : memref<128x64xbf16, #tpu.memory_space<vmem>>, vector<128x64xbf16>
    %cst_8 = arith.constant dense<0.000000e+00> : vector<8x64xf32>
    %10 = tpu.matmul %8, %9, %cst_8 {dimension_numbers = #tpu.dot_dimension_numbers<[1], [0], [0], [1], [0, 0, 1, 1], [], []>} : vector<8x128xbf16>, vector<128x64xbf16>, vector<8x64xf32> -> vector<8x64xf32>
    %c0_9 = arith.constant 0 : index
    %c0_10 = arith.constant 0 : index
    %11 = vector.load %arg5[%c0_9, %c0_10] : memref<1x64xf32, #tpu.memory_space<vmem>>, vector<1x64xf32>
    %12 = vector.broadcast %11 : vector<1x64xf32> to vector<8x64xf32>
    %13 = arith.addf %10, %12 : vector<8x64xf32>
    %cst_11 = arith.constant 0.000000e+00 : f32
    %14 = vector.broadcast %cst_11 : f32 to vector<8x64xf32>
    %15 = arith.maximumf %13, %14 : vector<8x64xf32>
    %16 = arith.truncf %15 : vector<8x64xf32> to vector<8x64xbf16>
    %c0_12 = arith.constant 0 : index
    %c0_13 = arith.constant 0 : index
    %17 = vector.load %arg6[%c0_12, %c0_13] : memref<64x128xbf16, #tpu.memory_space<vmem>>, vector<64x128xbf16>
    %cst_14 = arith.constant dense<0.000000e+00> : vector<8x128xf32>
    %18 = tpu.matmul %16, %17, %cst_14 {dimension_numbers = #tpu.dot_dimension_numbers<[1], [0], [0], [1], [0, 0, 1, 1], [], []>} : vector<8x64xbf16>, vector<64x128xbf16>, vector<8x128xf32> -> vector<8x128xf32>
    %c0_15 = arith.constant 0 : index
    %c0_16 = arith.constant 0 : index
    %19 = vector.load %arg7[%c0_15, %c0_16] : memref<1x128xf32, #tpu.memory_space<vmem>>, vector<1x128xf32>
    %20 = vector.broadcast %19 : vector<1x128xf32> to vector<8x128xf32>
    %21 = arith.addf %18, %20 : vector<8x128xf32>
    %c0_17 = arith.constant 0 : index
    %c0_18 = arith.constant 0 : index
    %22 = vector.load %arg8[%c0_17, %c0_18] : memref<8x128xf32, #tpu.memory_space<vmem>>, vector<8x128xf32>
    tpu.vector_store %arg8[%c0_17, %c0_18], %21 {strides = array<i32>} : memref<8x128xf32, #tpu.memory_space<vmem>>, vector<8x128xf32>,
    return
  }
  func.func @transform_0(%arg0: i32) -> (i32, i32) {
    %c0_i32 = arith.constant 0 : i32
    %c0_i32_0 = arith.constant 0 : i32
    return %arg0, %c0_i32 : i32, i32
  }
  func.func @transform_1(%arg0: i32) -> (i32, i32) {
    %c0_i32 = arith.constant 0 : i32
    %c0_i32_0 = arith.constant 0 : i32
    %c0_i32_1 = arith.constant 0 : i32
    return %c0_i32, %c0_i32_0 : i32, i32
  }
  func.func @transform_2(%arg0: i32) -> (i32, i32) {
    %c0_i32 = arith.constant 0 : i32
    %c0_i32_0 = arith.constant 0 : i32
    %c0_i32_1 = arith.constant 0 : i32
    return %c0_i32, %c0_i32_0 : i32, i32
  }
  func.func @transform_3(%arg0: i32) -> (i32, i32) {
    %c0_i32 = arith.constant 0 : i32
    %c0_i32_0 = arith.constant 0 : i32
    %c0_i32_1 = arith.constant 0 : i32
    return %c0_i32, %c0_i32_0 : i32, i32
  }
  func.func @transform_4(%arg0: i32) -> (i32, i32) {
    %c0_i32 = arith.constant 0 : i32
    %c0_i32_0 = arith.constant 0 : i32
    %c0_i32_1 = arith.constant 0 : i32
    return %c0_i32, %c0_i32_0 : i32, i32
  }
  func.func @transform_5(%arg0: i32) -> (i32, i32) {
    %c0_i32 = arith.constant 0 : i32
    %c0_i32_0 = arith.constant 0 : i32
    %c0_i32_1 = arith.constant 0 : i32
    return %c0_i32, %c0_i32_0 : i32, i32
  }
  func.func @transform_6(%arg0: i32) -> (i32, i32) {
    %c0_i32 = arith.constant 0 : i32
    %c0_i32_0 = arith.constant 0 : i32
    %c0_i32_1 = arith.constant 0 : i32
    return %c0_i32, %c0_i32_0 : i32, i32
  }
  func.func @transform_7(%arg0: i32) -> (i32, i32) {
    %c0_i32 = arith.constant 0 : i32
    %c0_i32_0 = arith.constant 0 : i32
    return %arg0, %c0_i32 : i32, i32
  }
}

</mosaic_0001>

<llo_original>
// kernel: tpu_custom_call.1
$region0: #{tpu_custom_call.1}
  #allocation0 [shape = 'u32[]', space=smem, size = 0x4, offset = 0x4, fixed_abs, tag = 'smem constant byte address 0x4 - core index']
  #allocation1 [shape = 'u32[144,128]{1,0:T(1,128)}', space=vmem, size = 0x12000, scoped, tag = 'internal scratch']
  %s0 = inlined_call_operand.vmem [shape: bf16[8,8], index: 0, kind: input, shape index: {}]
  %s1 = inlined_call_operand.vmem [shape: bf16[8,128], index: 1, kind: input, shape index: {}]
  %s2 = inlined_call_operand.vmem [shape: f32[1,128], index: 2, kind: input, shape index: {}]
  %s3 = inlined_call_operand.vmem [shape: bf16[128,64], index: 3, kind: input, shape index: {}]
  %s4 = inlined_call_operand.vmem [shape: f32[1,64], index: 4, kind: input, shape index: {}]
  %s5 = inlined_call_operand.vmem [shape: bf16[64,128], index: 5, kind: input, shape index: {}]
  %s6 = inlined_call_operand.vmem [shape: f32[1,128], index: 6, kind: input, shape index: {}]
  %s7 = inlined_call_operand.hbm [shape: f32[8,128], index: 7, kind: output, shape index: {}]
  %s8 = sld [smem:[#allocation0]]
  $region38: #{tpu_custom_call.1} parent=0
    _
  %s10 = ssub.s32 1, %s8
  %s11 = scalar_select 0, %s10, %s8
  $region1: #{tpu_custom_call.1} parent=0
    #allocation2 [shape = 'u8[4096]{0}', space=vmem, size = 0x1000, scoped, tag = 'output window, operand 0, single buffered']
    #allocation3 [shape = 's32[1]{0}', space=sflag, size = 0x4, scoped, tag = 'scoped memory for tpu_custom_call.1']
    %12 = vsyncpa [#allocation3], 0
    // Predicated region
    $region2: #{tpu_custom_call.1} parent=1 // pred_check
      _
    $region3: #{tpu_custom_call.1} parent=1 // pred_check_branch
      %14 = sbr.rel (0) target = $region5
    $region4: #{tpu_custom_call.1} parent=1 // pred_region
      _
    $region5: #{tpu_custom_call.1} parent=1 // pred_fallthru
      _
    // Predicated region
    $region6: #{tpu_custom_call.1} parent=1 // pred_check
      _
    $region7: #{tpu_custom_call.1} parent=1 // pred_check_branch
      %16 = sbr.rel (0) target = $region9
    $region8: #{tpu_custom_call.1} parent=1 // pred_region
      _
    $region9: #{tpu_custom_call.1} parent=1 // pred_fallthru
      _
    // Predicated region
    $region10: #{tpu_custom_call.1} parent=1 // pred_check
      _
    $region11: #{tpu_custom_call.1} parent=1 // pred_check_branch
      %18 = sbr.rel (0) target = $region13
    $region12: #{tpu_custom_call.1} parent=1 // pred_region
      _
    $region13: #{tpu_custom_call.1} parent=1 // pred_fallthru
      _
    // Predicated region
    $region14: #{tpu_custom_call.1} parent=1 // pred_check
      _
    $region15: #{tpu_custom_call.1} parent=1 // pred_check_branch
      %20 = sbr.rel (0) target = $region17
    $region16: #{tpu_custom_call.1} parent=1 // pred_region
      _
    $region17: #{tpu_custom_call.1} parent=1 // pred_fallthru
      _
    // Predicated region
    $region18: #{tpu_custom_call.1} parent=1 // pred_check
      _
    $region19: #{tpu_custom_call.1} parent=1 // pred_check_branch
      %22 = sbr.rel (0) target = $region21
    $region20: #{tpu_custom_call.1} parent=1 // pred_region
      _
    $region21: #{tpu_custom_call.1} parent=1 // pred_fallthru
      _
    // Predicated region
    $region22: #{tpu_custom_call.1} parent=1 // pred_check
      _
    $region23: #{tpu_custom_call.1} parent=1 // pred_check_branch
      %24 = sbr.rel (0) target = $region25
    $region24: #{tpu_custom_call.1} parent=1 // pred_region
      _
    $region25: #{tpu_custom_call.1} parent=1 // pred_fallthru
      _
    // Predicated region
    $region26: #{tpu_custom_call.1} parent=1 // pred_check
      _
    $region27: #{tpu_custom_call.1} parent=1 // pred_check_branch
      %26 = sbr.rel (0) target = $region29
    $region28: #{tpu_custom_call.1} parent=1 // pred_region
      _
    $region29: #{tpu_custom_call.1} parent=1 // pred_fallthru
      _
    %v28 = vld [vmem:[%s0] sm:$0xf]
    %v29 = vld [vmem:[%s1] sm:$0xf]
    %v30 = vld [vmem:[%s2] sm:$0x1]
    %v32 = vlaneseq
    %v33 = vshrl.u32 %v32, 7
    %v34 = vsub.s32 0, %v33
    %v35 = vrot.slane %v30, %v34
    %vm37 = vcmask 64512
    %v39 = vsel %vm37, %v28, 0
    %vm41 = vcmask 1043456
    %v43 = vsel %vm41, %v29, 0
    %45 = vmatprep.subr.bf16.mxu0 0
    %46 = vmatpush1.bf16.msra.mxu0 %v43
    %47 = vmatprep.subr.bf16.mxu0 0
    %48 = vmatpush1.bf16.msra.mxu0 0
    %49 = vmatprep.subr.bf16.mxu0 0
    %50 = vmatpush1.bf16.msra.mxu0 0
    %51 = vmatprep.subr.bf16.mxu0 0
    %52 = vmatpush1.bf16.msra.mxu0 0
    %53 = vmatprep.subr.bf16.mxu0 0
    %54 = vmatpush1.bf16.msra.mxu0 0
    %55 = vmatprep.subr.bf16.mxu0 0
    %56 = vmatpush1.bf16.msra.mxu0 0
    %57 = vmatprep.subr.bf16.mxu0 0
    %58 = vmatpush1.bf16.msra.mxu0 0
    %59 = vmatprep.subr.bf16.mxu0 0
    %60 = vmatpush1.bf16.msra.mxu0 0
    %61 = vmatprep.subr.bf16.mxu0 0
    %62 = vmatpush1.bf16.msra.mxu0 0
    %63 = vmatprep.subr.bf16.mxu0 0
    %64 = vmatpush1.bf16.msra.mxu0 0
    %65 = vmatprep.subr.bf16.mxu0 0
    %66 = vmatpush1.bf16.msra.mxu0 0
    %67 = vmatprep.subr.bf16.mxu0 0
    %68 = vmatpush1.bf16.msra.mxu0 0
    %69 = vmatprep.subr.bf16.mxu0 0
    %70 = vmatpush1.bf16.msra.mxu0 0
    %71 = vmatprep.subr.bf16.mxu0 0
    %72 = vmatpush1.bf16.msra.mxu0 0
    %73 = vmatprep.subr.bf16.mxu0 0
    %74 = vmatpush1.bf16.msra.mxu0 0
    %75 = vmatprep.subr.bf16.mxu0 0
    %76 = vmatpush1.bf16.msra.mxu0 0
    %77 = vmatprep.mubr.bf16.mxu0 0
    %78 = vmatmul.mubr.bf16.gmra.mrb[0].mxu0 %v39
    %v79 = vpop.f32.mrb[0].mxu0
    %v80 = vadd.f32 %v35, %v79
    %v81 = vpop.f32.mrb[0].mxu0
    %v82 = vpop.f32.mrb[0].mxu0
    %v83 = vpop.f32.mrb[0].mxu0
    %84 = vdwg.mxu0
    %v85 = vmax.f32 %v80, 0.0
    %v86 = vpack.c.bf16 %v85, %v85
    %v87 = vld [vmem:[%s3] sm:$0xf]
    %v88 = vld [vmem:[%s3 + $0x4] sm:$0xf]
    %v89 = vld [vmem:[%s3 + $0x8] sm:$0xf]
    %v90 = vld [vmem:[%s3 + $0xc] sm:$0xf]
    %v91 = vld [vmem:[%s3 + $0x10] sm:$0xf]
    %v92 = vld [vmem:[%s3 + $0x14] sm:$0xf]
    %v93 = vld [vmem:[%s3 + $0x18] sm:$0xf]
    %v94 = vld [vmem:[%s3 + $0x1c] sm:$0xf]
    %v95 = vld [vmem:[%s3 + $0x20] sm:$0xf]
    %v96 = vld [vmem:[%s3 + $0x24] sm:$0xf]
    %v97 = vld [vmem:[%s3 + $0x28] sm:$0xf]
    %v98 = vld [vmem:[%s3 + $0x2c] sm:$0xf]
    %v99 = vld [vmem:[%s3 + $0x30] sm:$0xf]
    %v100 = vld [vmem:[%s3 + $0x34] sm:$0xf]
    %v101 = vld [vmem:[%s3 + $0x38] sm:$0xf]
    %v102 = vld [vmem:[%s3 + $0x3c] sm:$0xf]
    %v103 = vld [vmem:[%s4] sm:$0x1]
    %v105 = vlaneseq
    %v106 = vshrl.u32 %v105, 7
    %v107 = vsub.s32 0, %v106
    %v108 = vrot.slane %v103, %v107
    %v126 = vunpack.c.l.b16 %v87
    %v127 = vunpack.c.l.b16 %v88
    %v128 = vunpack.c.l.b16 %v89
    %v129 = vunpack.c.l.b16 %v90
    %v130 = vunpack.c.l.b16 %v91
    %v131 = vunpack.c.l.b16 %v92
    %v132 = vunpack.c.l.b16 %v93
    %v133 = vunpack.c.l.b16 %v94
    %v134 = vunpack.c.l.b16 %v95
    %v135 = vunpack.c.l.b16 %v96
    %v136 = vunpack.c.l.b16 %v97
    %v137 = vunpack.c.l.b16 %v98
    %v138 = vunpack.c.l.b16 %v99
    %v139 = vunpack.c.l.b16 %v100
    %v140 = vunpack.c.l.b16 %v101
    %v141 = vunpack.c.l.b16 %v102
    %v142 = vpack.c.b16 %v127, %v126
    %v143 = vpack.c.b16 %v129, %v128
    %v144 = vpack.c.b16 %v131, %v130
    %v145 = vpack.c.b16 %v133, %v132
    %v146 = vpack.c.b16 %v135, %v134
    %v147 = vpack.c.b16 %v137, %v136
    %v148 = vpack.c.b16 %v139, %v138
    %v149 = vpack.c.b16 %v141, %v140
    %158 = vmatprep.subr.bf16.mxu0 0
    %159 = vmatpush1.bf16.msra.mxu0 %v142
    %160 = vmatprep.subr.bf16.mxu0 0
    %161 = vmatpush1.bf16.msra.mxu0 %v143
    %162 = vmatprep.subr.bf16.mxu0 0
    %163 = vmatpush1.bf16.msra.mxu0 %v144
    %164 = vmatprep.subr.bf16.mxu0 0
    %165 = vmatpush1.bf16.msra.mxu0 %v145
    %166 = vmatprep.subr.bf16.mxu0 0
    %167 = vmatpush1.bf16.msra.mxu0 %v146
    %168 = vmatprep.subr.bf16.mxu0 0
    %169 = vmatpush1.bf16.msra.mxu0 %v147
    %170 = vmatprep.subr.bf16.mxu0 0
    %171 = vmatpush1.bf16.msra.mxu0 %v148
    %172 = vmatprep.subr.bf16.mxu0 0
    %173 = vmatpush1.bf16.msra.mxu0 %v149
    %174 = vmatprep.subr.bf16.mxu0 0
    %175 = vmatpush1.bf16.msra.mxu0 0
    %176 = vmatprep.subr.bf16.mxu0 0
    %177 = vmatpush1.bf16.msra.mxu0 0
    %178 = vmatprep.subr.bf16.mxu0 0
    %179 = vmatpush1.bf16.msra.mxu0 0
    %180 = vmatprep.subr.bf16.mxu0 0
    %181 = vmatpush1.bf16.msra.mxu0 0
    %182 = vmatprep.subr.bf16.mxu0 0
    %183 = vmatpush1.bf16.msra.mxu0 0
    %184 = vmatprep.subr.bf16.mxu0 0
    %185 = vmatpush1.bf16.msra.mxu0 0
    %186 = vmatprep.subr.bf16.mxu0 0
    %187 = vmatpush1.bf16.msra.mxu0 0
    %188 = vmatprep.subr.bf16.mxu0 0
    %189 = vmatpush1.bf16.msra.mxu0 0
    %190 = vmatprep.mubr.bf16.mxu0 0
    %191 = vmatmul.mubr.bf16.gmra.mrb[0].mxu0 %v86
    %v192 = vpop.f32.mrb[0].mxu0
    %v193 = vadd.f32 %v108, %v192
    %v194 = vpop.f32.mrb[0].mxu0
    %v195 = vpop.f32.mrb[0].mxu0
    %v196 = vpop.f32.mrb[0].mxu0
    %197 = vdwg.mxu0
    %v198 = vmax.f32 %v193, 0.0
    %v199 = vpack.c.bf16 %v198, %v198
    %v200 = vld [vmem:[%s5] sm:$0xf]
    %v201 = vld [vmem:[%s5 + $0x4] sm:$0xf]
    %v202 = vld [vmem:[%s5 + $0x8] sm:$0xf]
    %v203 = vld [vmem:[%s5 + $0xc] sm:$0xf]
    %v204 = vld [vmem:[%s5 + $0x10] sm:$0xf]
    %v205 = vld [vmem:[%s5 + $0x14] sm:$0xf]
    %v206 = vld [vmem:[%s5 + $0x18] sm:$0xf]
    %v207 = vld [vmem:[%s5 + $0x1c] sm:$0xf]
    %v208 = vld [vmem:[%s6] sm:$0x1]
    %v210 = vlaneseq
    %v211 = vshrl.u32 %v210, 7
    %v212 = vsub.s32 0, %v211
    %v213 = vrot.slane %v208, %v212
    %v223 = vunpack.c.l.b16 %v200
    %v224 = vunpack.c.l.b16 %v201
    %v225 = vunpack.c.l.b16 %v202
    %v226 = vunpack.c.l.b16 %v203
    %v227 = vunpack.c.l.b16 %v204
    %v228 = vunpack.c.l.b16 %v205
    %v229 = vunpack.c.l.b16 %v206
    %v230 = vunpack.c.l.b16 %v207
    %v231 = vpack.c.b16 %v224, %v223
    %v232 = vpack.c.b16 %v226, %v225
    %v233 = vpack.c.b16 %v228, %v227
    %v234 = vpack.c.b16 %v230, %v229
    %vm239 = vcmask 523264
    %v241 = vsel %vm239, %v199, 0
    %243 = vmatprep.subr.bf16.mxu0 0
    %244 = vmatpush1.bf16.msra.mxu0 %v231
    %245 = vmatprep.subr.bf16.mxu0 0
    %246 = vmatpush1.bf16.msra.mxu0 %v232
    %247 = vmatprep.subr.bf16.mxu0 0
    %248 = vmatpush1.bf16.msra.mxu0 %v233
    %249 = vmatprep.subr.bf16.mxu0 0
    %250 = vmatpush1.bf16.msra.mxu0 %v234
    %251 = vmatprep.subr.bf16.mxu0 0
    %252 = vmatpush1.bf16.msra.mxu0 0
    %253 = vmatprep.subr.bf16.mxu0 0
    %254 = vmatpush1.bf16.msra.mxu0 0
    %255 = vmatprep.subr.bf16.mxu0 0
    %256 = vmatpush1.bf16.msra.mxu0 0
    %257 = vmatprep.subr.bf16.mxu0 0
    %258 = vmatpush1.bf16.msra.mxu0 0
    %259 = vmatprep.subr.bf16.mxu0 0
    %260 = vmatpush1.bf16.msra.mxu0 0
    %261 = vmatprep.subr.bf16.mxu0 0
    %262 = vmatpush1.bf16.msra.mxu0 0
    %263 = vmatprep.subr.bf16.mxu0 0
    %264 = vmatpush1.bf16.msra.mxu0 0
    %265 = vmatprep.subr.bf16.mxu0 0
    %266 = vmatpush1.bf16.msra.mxu0 0
    %267 = vmatprep.subr.bf16.mxu0 0
    %268 = vmatpush1.bf16.msra.mxu0 0
    %269 = vmatprep.subr.bf16.mxu0 0
    %270 = vmatpush1.bf16.msra.mxu0 0
    %271 = vmatprep.subr.bf16.mxu0 0
    %272 = vmatpush1.bf16.msra.mxu0 0
    %273 = vmatprep.subr.bf16.mxu0 0
    %274 = vmatpush1.bf16.msra.mxu0 0
    %275 = vmatprep.mubr.bf16.mxu0 0
    %276 = vmatmul.mubr.bf16.gmra.mrb[0].mxu0 %v241
    %v277 = vpop.f32.mrb[0].mxu0
    %v278 = vadd.f32 %v213, %v277
    %v279 = vpop.f32.mrb[0].mxu0
    %v280 = vpop.f32.mrb[0].mxu0
    %v281 = vpop.f32.mrb[0].mxu0
    %282 = vdwg.mxu0
    %283 = vst [vmem:[#allocation2] sm:$0xff] %v278
    // Predicated region
    $region30: #{tpu_custom_call.1} parent=1 // pred_check
      _
    $region31: #{tpu_custom_call.1} parent=1 // pred_check_branch
      %285 = sbr.rel (0) target = $region33
    $region32: #{tpu_custom_call.1} parent=1 // pred_region
      %s287 = ssub.s32 128, 128
      %288 = vsyncadd [#allocation3], %s287
      %s290 = sshll.u32 [#allocation2], 4
      %s291 = int_to_ptr.vmem [resolvable:$true] %s290
      %293 = dma.vmem_to_hbm [thread:$0]  %s291, 128, %s7, [#allocation3]
    $region33: #{tpu_custom_call.1} parent=1 // pred_fallthru
      _
    // Predicated region
    $region34: #{tpu_custom_call.1} parent=1 // pred_check
      _
    $region35: #{tpu_custom_call.1} parent=1 // pred_check_branch
      %295 = sbr.rel (0) target = $region37
    $region36: #{tpu_custom_call.1} parent=1 // pred_region
      %296 = dma.done [#allocation3], 128
    $region37: #{tpu_custom_call.1} parent=1 // pred_fallthru
      _
    %297 = vsyncpa [#allocation3], 1

</llo_original>
